<compile_context>
chip_gen: v7x
topology: tpu7x:2x2x1
jax: 0.10.0
libtpu: 0.0.40
codegen_flags: <defaults>
</compile_context>

<pallas_src>
import numpy as np
import jax
import jax.numpy as jnp
from jax import lax
from jax.experimental import pallas as pl
from jax.experimental.pallas import tpu as pltpu


# ----------------------------------------------------------------------------
# Bilinear interpolation weights (PyTorch F.interpolate, align_corners=False).
# Size-only constants, built on host and composed into a single pixel operator.
# ----------------------------------------------------------------------------
def _interp_matrix(in_size: int, out_size: int) -> np.ndarray:
    m = np.zeros((out_size, in_size), dtype=np.float32)
    scale = in_size / out_size
    for d in range(out_size):
        src = max((d + 0.5) * scale - 0.5, 0.0)
        i0 = min(int(np.floor(src)), in_size - 1)
        i1 = min(i0 + 1, in_size - 1)
        frac = src - i0
        m[d, i0] += 1.0 - frac
        m[d, i1] += frac
    return m


def _bilinear_pixel_matrix(in_hw, out_hw) -> np.ndarray:
    """(H_out*W_out, H_in*W_in) operator on a row-major flattened pixel axis."""
    ry = _interp_matrix(in_hw[0], out_hw[0])
    rx = _interp_matrix(in_hw[1], out_hw[1])
    return np.kron(ry, rx).astype(np.float32)


def _pick_tile(total: int, max_tile: int = 512) -> int:
    """Largest divisor of `total` that is <= max_tile and a multiple of 8;
    falls back to the full extent (always a legal block size)."""
    best = None
    for d in range(8, min(total, max_tile) + 1, 8):
        if total % d == 0:
            best = d
    return best if best is not None else total


def _im2col_3x3(x_nhwc):
    """(N, H, W, C) -> (N, H*W, 9*C) im2col slab for a 3x3 / pad=1 conv.
    Channel order is (dy, dx, c_in), matching w0.reshape(9*C, C_out)."""
    N, H, W, C = x_nhwc.shape
    xp = jnp.pad(x_nhwc, ((0, 0), (1, 1), (1, 1), (0, 0)))
    cols = [xp[:, dy:dy + H, dx:dx + W, :] for dy in range(3) for dx in range(3)]
    return jnp.concatenate(cols, axis=-1).reshape(N, H * W, 9 * C)


# ----------------------------------------------------------------------------
# Fused kernel: conv3x3(+BN+ReLU) and conv1x1(+bias) computed once per batch
# element (tile 0) into a persistent VMEM scratch, then one composed-resize
# matmul per output-pixel tile.
#   col  : (N, HW, 9*C_in)     bf16   (per-batch block, resident across tiles)
#   w0   : (9*C_in, 256)       bf16
#   scale: (1, 256)            f32    (folded BN scale)
#   bias : (1, 256)            f32    (folded conv bias + BN bias)
#   w1   : (256, C_pad)        bf16   (zero-padded, lane-dense)
#   b1   : (1, C_pad)          f32
#   m    : (P_out, HW)         bf16   (composed M2 @ M1, output-pixel tiled)
#   out  : (N, P_out, C_pad)   f32
# ----------------------------------------------------------------------------
def _up_fused_kernel(col_ref, w0_ref, scale_ref, bias_ref, w1_ref, b1_ref,
                     m_ref, o_ref, t_ref):
    @pl.when(pl.program_id(1) == 0)
    def _():
        # 3x3 conv as a single im2col matmul, folded BN affine, ReLU.
        acc = jnp.dot(col_ref[0], w0_ref[...], preferred_element_type=jnp.float32)
        y = jnp.maximum(acc * scale_ref[...] + bias_ref[...], 0.0)
        # 1x1 conv + bias (commutes with the pixel-linear resizes).
        t = jnp.dot(y.astype(jnp.bfloat16), w1_ref[...],
                    preferred_element_type=jnp.float32)
        t_ref[...] = (t + b1_ref[...]).astype(t_ref.dtype)

    # Composed bilinear resize for this output-pixel tile.
    o_ref[0] = jnp.dot(m_ref[...], t_ref[...], preferred_element_type=jnp.float32)


def up_fused(col, w0_r, scale, bias, w1_pad, b1_pad, m):
    N, P_in, K9 = col.shape
    C_mid = w0_r.shape[1]
    C_pad = w1_pad.shape[1]
    P_out = m.shape[0]
    tile = _pick_tile(P_out, 512)
    return pl.pallas_call(
        _up_fused_kernel,
        out_shape=jax.ShapeDtypeStruct((N, P_out, C_pad), jnp.float32),
        grid=(N, P_out // tile),
        in_specs=[
            pl.BlockSpec((1, P_in, K9), lambda n, j: (n, 0, 0)),
            pl.BlockSpec((K9, C_mid), lambda n, j: (0, 0)),
            pl.BlockSpec((1, C_mid), lambda n, j: (0, 0)),
            pl.BlockSpec((1, C_mid), lambda n, j: (0, 0)),
            pl.BlockSpec((C_mid, C_pad), lambda n, j: (0, 0)),
            pl.BlockSpec((1, C_pad), lambda n, j: (0, 0)),
            pl.BlockSpec((tile, P_in), lambda n, j: (j, 0)),
        ],
        out_specs=pl.BlockSpec((1, tile, C_pad), lambda n, j: (n, j, 0)),
        scratch_shapes=[pltpu.VMEM((P_in, C_pad), jnp.bfloat16)],
        compiler_params=pltpu.CompilerParams(
            dimension_semantics=("parallel", "arbitrary")),
    )(col, w0_r, scale, bias, w1_pad, b1_pad, m)


# ----------------------------------------------------------------------------
# Up module (Pallas version).
# ----------------------------------------------------------------------------
class UpPallas:
    C_MID = 256  # hard-coded in the PyTorch module (conv_0 output channels)

    def __init__(self, img_size, embed_dim, channels, key):
        self.img_size = img_size
        self.embed_dim = embed_dim
        self.channels = channels
        ks = jax.random.split(key, 8)
        cm = self.C_MID
        # conv_0: 3x3, embed_dim -> 256 (HWIO layout)
        self.w0 = 0.05 * jax.random.normal(ks[0], (3, 3, embed_dim, cm), jnp.float32)
        self.b0 = 0.05 * jax.random.normal(ks[1], (cm,), jnp.float32)
        # BatchNorm(256) parameters / running stats (inference form)
        self.gamma = 1.0 + 0.1 * jax.random.normal(ks[2], (cm,), jnp.float32)
        self.beta = 0.1 * jax.random.normal(ks[3], (cm,), jnp.float32)
        self.mean = 0.1 * jax.random.normal(ks[4], (cm,), jnp.float32)
        self.var = 1.0 + 0.1 * jnp.abs(jax.random.normal(ks[5], (cm,), jnp.float32))
        self.eps = 1e-5
        # conv_1: 1x1, 256 -> channels
        self.w1 = 0.05 * jax.random.normal(ks[6], (cm, channels), jnp.float32)
        self.b1 = 0.05 * jax.random.normal(ks[7], (channels,), jnp.float32)

        # --- precomputed kernel operands (bf16 matmul inputs, f32 affine) ----
        self.w0_r = self.w0.reshape(9 * embed_dim, cm).astype(jnp.bfloat16)
        inv_std = 1.0 / jnp.sqrt(self.var + self.eps)
        scale = self.gamma * inv_std
        bias = (self.b0 - self.mean) * scale + self.beta    # conv bias folded in
        self.scale = scale.reshape(1, cm)
        self.bias = bias.reshape(1, cm)
        self.c_pad = ((channels + 127) // 128) * 128        # lane-dense output
        self.w1_pad = jnp.zeros((cm, self.c_pad), jnp.bfloat16
                                ).at[:, :channels].set(self.w1.astype(jnp.bfloat16))
        self.b1_pad = jnp.zeros((1, self.c_pad), jnp.float32
                                ).at[:, :channels].set(self.b1)
        self._m_cache = {}                                  # (H, W) -> device M

    def _pixel_operator(self, H, W):
        key = (H, W)
        if key not in self._m_cache:
            mid = W // 2                                    # F.interpolate(size=x.shape[-1]//2)
            m1 = _bilinear_pixel_matrix((H, W), (mid, mid))
            m2 = _bilinear_pixel_matrix((mid, mid), (self.img_size, self.img_size))
            m = (m2 @ m1).astype(np.float32)                # composed resize operator
            self._m_cache[key] = jnp.asarray(m).astype(jnp.bfloat16)
        return self._m_cache[key]

    def __call__(self, x_nchw):
        N, C, H, W = x_nchw.shape
        assert C == self.embed_dim
        x = jnp.transpose(x_nchw, (0, 2, 3, 1))             # NCHW -> NHWC
        col = _im2col_3x3(x).astype(jnp.bfloat16)           # (N, HW, 9*C_in)
        m = self._pixel_operator(H, W)                      # (img^2, HW) bf16
        out = up_fused(col, self.w0_r, self.scale, self.bias,
                       self.w1_pad, self.b1_pad, m)         # (N, img^2, C_pad) f32
        out = out[..., :self.channels]
        out = out.reshape(N, self.img_size, self.img_size, self.channels)
        return jnp.transpose(out, (0, 3, 1, 2))             # NHWC -> NCHW


# ----------------------------------------------------------------------------
# Pure-JAX f32 reference (sequential op order, exactly as the PyTorch module).
# ----------------------------------------------------------------------------
def reference_forward(mod: UpPallas, x_nchw):
    x = jnp.transpose(x_nchw, (0, 2, 3, 1))
    y = lax.conv_general_dilated(
        x, mod.w0, window_strides=(1, 1), padding="SAME",
        dimension_numbers=("NHWC", "HWIO", "NHWC")) + mod.b0
    y = (y - mod.mean) / jnp.sqrt(mod.var + mod.eps) * mod.gamma + mod.beta
    y = jnp.maximum(y, 0.0)
    N, H, W, Cm = y.shape
    y = y.reshape(N, H * W, Cm)
    mid = W // 2
    m1 = jnp.asarray(_bilinear_pixel_matrix((H, W), (mid, mid)))
    m2 = jnp.asarray(_bilinear_pixel_matrix((mid, mid), (mod.img_size, mod.img_size)))
    y = jnp.einsum("pq,nqc->npc", m1, y)
    y = jnp.einsum("npc,cd->npd", y, mod.w1) + mod.b1
    y = jnp.einsum("pq,nqc->npc", m2, y)
    y = y.reshape(N, mod.img_size, mod.img_size, mod.channels)
    return jnp.transpose(y, (0, 3, 1, 2))


if __name__ == "__main__":
    key = jax.random.PRNGKey(0)
    k_param, k_x = jax.random.split(key)

    # Small shapes consistent with the module: batch=2, embed_dim=16,
    # spatial 8x8 feature map, img_size=16, output channels=16.
    N, EMBED, H, W = 2, 16, 8, 8
    IMG_SIZE, CHANNELS = 16, 16

    mod = UpPallas(img_size=IMG_SIZE, embed_dim=EMBED, channels=CHANNELS, key=k_param)
    x = jax.random.normal(k_x, (N, EMBED, H, W), jnp.float32)

    out = mod(x)
    out = jax.block_until_ready(out)
    assert out.shape == (N, CHANNELS, IMG_SIZE, IMG_SIZE), out.shape

    ref = jax.block_until_ready(reference_forward(mod, x))
    # bf16 matmul operands (f32 accumulation) -> loosened tolerance vs f32 ref.
    if not np.allclose(np.asarray(out), np.asarray(ref), atol=3e-2, rtol=3e-2):
        max_err = float(np.max(np.abs(np.asarray(out) - np.asarray(ref))))
        raise AssertionError(f"Pallas output does not match JAX reference (max_err={max_err})")

    print("KERNEL_OK")
</pallas_src>

<mosaic_0001>
module attributes {stable_mosaic.version = 11 : i64} {
  func.func @_up_fused_kernel(%arg0: i32, %arg1: i32, %arg2: memref<1x64x144xbf16, #tpu.memory_space<vmem>>, %arg3: memref<144x256xbf16, #tpu.memory_space<vmem>>, %arg4: memref<1x256xf32, #tpu.memory_space<vmem>>, %arg5: memref<1x256xf32, #tpu.memory_space<vmem>>, %arg6: memref<256x128xbf16, #tpu.memory_space<vmem>>, %arg7: memref<1x128xf32, #tpu.memory_space<vmem>>, %arg8: memref<256x64xbf16, #tpu.memory_space<vmem>>, %arg9: memref<1x256x128xf32, #tpu.memory_space<vmem>>, %arg10: memref<64x128xbf16, #tpu.memory_space<vmem>>) attributes {dimension_semantics = [#tpu.dimension_semantics<parallel>, #tpu.dimension_semantics<arbitrary>], iteration_bounds = array<i64: 2, 1>, scalar_prefetch = 0 : i64, scratch_operands = 1 : i64, tpu.core_type = #tpu.core_type<tc>, window_params = [{transform_indices = @transform_0, window_bounds = array<i64: 1, 64, 144>}, {pipeline_mode = #tpu.pipeline_mode<synchronous>, transform_indices = @transform_1, window_bounds = array<i64: 144, 256>}, {pipeline_mode = #tpu.pipeline_mode<synchronous>, transform_indices = @transform_2, window_bounds = array<i64: 1, 256>}, {pipeline_mode = #tpu.pipeline_mode<synchronous>, transform_indices = @transform_3, window_bounds = array<i64: 1, 256>}, {pipeline_mode = #tpu.pipeline_mode<synchronous>, transform_indices = @transform_4, window_bounds = array<i64: 256, 128>}, {pipeline_mode = #tpu.pipeline_mode<synchronous>, transform_indices = @transform_5, window_bounds = array<i64: 1, 128>}, {transform_indices = @transform_6, window_bounds = array<i64: 256, 64>}, {transform_indices = @transform_7, window_bounds = array<i64: 1, 256, 128>}]} {
    %c0_i32 = arith.constant 0 : i32
    %0 = arith.cmpi eq, %arg1, %c0_i32 : i32
    %1 = arith.extui %0 : i1 to i32
    %c0_i32_0 = arith.constant 0 : i32
    %2 = arith.cmpi ne, %1, %c0_i32_0 : i32
    scf.if %2 {
      %c0_7 = arith.constant 0 : index
      %c0_8 = arith.constant 0 : index
      %c0_9 = arith.constant 0 : index
      %9 = vector.load %arg2[%c0_7, %c0_8, %c0_9] : memref<1x64x144xbf16, #tpu.memory_space<vmem>>, vector<1x64x144xbf16>
      %10 = vector.shape_cast %9 : vector<1x64x144xbf16> to vector<64x144xbf16>
      %c0_10 = arith.constant 0 : index
      %c0_11 = arith.constant 0 : index
      %11 = vector.load %arg3[%c0_10, %c0_11] : memref<144x256xbf16, #tpu.memory_space<vmem>>, vector<144x256xbf16>
      %cst_12 = arith.constant dense<0.000000e+00> : vector<64x256xf32>
      %12 = tpu.matmul %10, %11, %cst_12 {dimension_numbers = #tpu.dot_dimension_numbers<[1], [0], [0], [1], [0, 0, 1, 1], [], []>} : vector<64x144xbf16>, vector<144x256xbf16>, vector<64x256xf32> -> vector<64x256xf32>
      %c0_13 = arith.constant 0 : index
      %c0_14 = arith.constant 0 : index
      %13 = vector.load %arg4[%c0_13, %c0_14] : memref<1x256xf32, #tpu.memory_space<vmem>>, vector<1x256xf32>
      %14 = vector.broadcast %13 : vector<1x256xf32> to vector<64x256xf32>
      %15 = arith.mulf %12, %14 : vector<64x256xf32>
      %c0_15 = arith.constant 0 : index
      %c0_16 = arith.constant 0 : index
      %16 = vector.load %arg5[%c0_15, %c0_16] : memref<1x256xf32, #tpu.memory_space<vmem>>, vector<1x256xf32>
      %17 = vector.broadcast %16 : vector<1x256xf32> to vector<64x256xf32>
      %18 = arith.addf %15, %17 : vector<64x256xf32>
      %cst_17 = arith.constant 0.000000e+00 : f32
      %19 = vector.broadcast %cst_17 : f32 to vector<64x256xf32>
      %20 = arith.maximumf %18, %19 : vector<64x256xf32>
      %21 = arith.truncf %20 : vector<64x256xf32> to vector<64x256xbf16>
      %c0_18 = arith.constant 0 : index
      %c0_19 = arith.constant 0 : index
      %22 = vector.load %arg6[%c0_18, %c0_19] : memref<256x128xbf16, #tpu.memory_space<vmem>>, vector<256x128xbf16>
      %cst_20 = arith.constant dense<0.000000e+00> : vector<64x128xf32>
      %23 = tpu.matmul %21, %22, %cst_20 {dimension_numbers = #tpu.dot_dimension_numbers<[1], [0], [0], [1], [0, 0, 1, 1], [], []>} : vector<64x256xbf16>, vector<256x128xbf16>, vector<64x128xf32> -> vector<64x128xf32>
      %c0_21 = arith.constant 0 : index
      %c0_22 = arith.constant 0 : index
      %24 = vector.load %arg7[%c0_21, %c0_22] : memref<1x128xf32, #tpu.memory_space<vmem>>, vector<1x128xf32>
      %25 = vector.broadcast %24 : vector<1x128xf32> to vector<64x128xf32>
      %26 = arith.addf %23, %25 : vector<64x128xf32>
      %27 = arith.truncf %26 : vector<64x128xf32> to vector<64x128xbf16>
      %c0_23 = arith.constant 0 : index
      %c0_24 = arith.constant 0 : index
      %28 = vector.load %arg10[%c0_23, %c0_24] : memref<64x128xbf16, #tpu.memory_space<vmem>>, vector<64x128xbf16>
      tpu.vector_store %arg10[%c0_23, %c0_24], %27 {strides = array<i32>} : memref<64x128xbf16, #tpu.memory_space<vmem>>, vector<64x128xbf16>,
    } else {
    }
    %c0 = arith.constant 0 : index
    %c0_1 = arith.constant 0 : index
    %3 = vector.load %arg8[%c0, %c0_1] : memref<256x64xbf16, #tpu.memory_space<vmem>>, vector<256x64xbf16>
    %c0_2 = arith.constant 0 : index
    %c0_3 = arith.constant 0 : index
    %4 = vector.load %arg10[%c0_2, %c0_3] : memref<64x128xbf16, #tpu.memory_space<vmem>>, vector<64x128xbf16>
    %cst = arith.constant dense<0.000000e+00> : vector<256x128xf32>
    %5 = tpu.matmul %3, %4, %cst {dimension_numbers = #tpu.dot_dimension_numbers<[1], [0], [0], [1], [0, 0, 1, 1], [], []>} : vector<256x64xbf16>, vector<64x128xbf16>, vector<256x128xf32> -> vector<256x128xf32>
    %c0_4 = arith.constant 0 : index
    %c0_5 = arith.constant 0 : index
    %c0_6 = arith.constant 0 : index
    %6 = vector.load %arg9[%c0_4, %c0_5, %c0_6] : memref<1x256x128xf32, #tpu.memory_space<vmem>>, vector<1x256x128xf32>
    %7 = vector.shape_cast %6 : vector<1x256x128xf32> to vector<256x128xf32>
    %8 = vector.shape_cast %5 : vector<256x128xf32> to vector<1x256x128xf32>
    tpu.vector_store %arg9[%c0_4, %c0_5, %c0_6], %8 {strides = array<i32>} : memref<1x256x128xf32, #tpu.memory_space<vmem>>, vector<1x256x128xf32>,
    return
  }
  func.func @transform_0(%arg0: i32, %arg1: i32) -> (i32, i32, i32) {
    %c0_i32 = arith.constant 0 : i32
    %c0_i32_0 = arith.constant 0 : i32
    %c0_i32_1 = arith.constant 0 : i32
    return %arg0, %c0_i32, %c0_i32_0 : i32, i32, i32
  }
  func.func @transform_1(%arg0: i32, %arg1: i32) -> (i32, i32) {
    %c0_i32 = arith.constant 0 : i32
    %c0_i32_0 = arith.constant 0 : i32
    %c0_i32_1 = arith.constant 0 : i32
    return %c0_i32, %c0_i32_0 : i32, i32
  }
  func.func @transform_2(%arg0: i32, %arg1: i32) -> (i32, i32) {
    %c0_i32 = arith.constant 0 : i32
    %c0_i32_0 = arith.constant 0 : i32
    %c0_i32_1 = arith.constant 0 : i32
    return %c0_i32, %c0_i32_0 : i32, i32
  }
  func.func @transform_3(%arg0: i32, %arg1: i32) -> (i32, i32) {
    %c0_i32 = arith.constant 0 : i32
    %c0_i32_0 = arith.constant 0 : i32
    %c0_i32_1 = arith.constant 0 : i32
    return %c0_i32, %c0_i32_0 : i32, i32
  }
  func.func @transform_4(%arg0: i32, %arg1: i32) -> (i32, i32) {
    %c0_i32 = arith.constant 0 : i32
    %c0_i32_0 = arith.constant 0 : i32
    %c0_i32_1 = arith.constant 0 : i32
    return %c0_i32, %c0_i32_0 : i32, i32
  }
  func.func @transform_5(%arg0: i32, %arg1: i32) -> (i32, i32) {
    %c0_i32 = arith.constant 0 : i32
    %c0_i32_0 = arith.constant 0 : i32
    %c0_i32_1 = arith.constant 0 : i32
    return %c0_i32, %c0_i32_0 : i32, i32
  }
  func.func @transform_6(%arg0: i32, %arg1: i32) -> (i32, i32) {
    %c0_i32 = arith.constant 0 : i32
    %c0_i32_0 = arith.constant 0 : i32
    return %arg1, %c0_i32 : i32, i32
  }
  func.func @transform_7(%arg0: i32, %arg1: i32) -> (i32, i32, i32) {
    %c0_i32 = arith.constant 0 : i32
    %c0_i32_0 = arith.constant 0 : i32
    return %arg0, %arg1, %c0_i32 : i32, i32, i32
  }
}

</mosaic_0001>

<llo_original>
// kernel: tpu_custom_call.1
$region0: #{tpu_custom_call.1}
  #allocation0 [shape = 'u32[]', space=smem, size = 0x4, offset = 0x4, fixed_abs, tag = 'smem constant byte address 0x4 - core index']
  #allocation1 [shape = 'u32[144,128]{1,0:T(1,128)}', space=vmem, size = 0x12000, scoped, tag = 'internal scratch']
  #allocation2 [shape = 'bf16[64,128]{1,0:T(16,128)(2,1)}', space=vmem, size = 0x4000, scoped, tag = 'scratch operand']
  %s0 = inlined_call_operand.hbm [shape: bf16[2,64,144], index: 0, kind: input, shape index: {}]
  %s1 = inlined_call_operand.vmem [shape: bf16[144,256], index: 1, kind: input, shape index: {}]
  %s2 = inlined_call_operand.vmem [shape: f32[1,256], index: 2, kind: input, shape index: {}]
  %s3 = inlined_call_operand.vmem [shape: f32[1,256], index: 3, kind: input, shape index: {}]
  %s4 = inlined_call_operand.hbm [shape: bf16[256,128], index: 4, kind: input, shape index: {}]
  %s5 = inlined_call_operand.vmem [shape: f32[1,128], index: 5, kind: input, shape index: {}]
  %s6 = inlined_call_operand.vmem [shape: bf16[256,64], index: 6, kind: input, shape index: {}]
  %s7 = inlined_call_operand.hbm [shape: f32[2,256,128], index: 7, kind: output, shape index: {}]
  %s8 = sld [smem:[#allocation0]]
  $region73: #{tpu_custom_call.1} parent=0
    _
  %s10 = ssub.s32 1, %s8
  %s11 = scalar_select 0, %s10, %s8
  $region1: #{tpu_custom_call.1} parent=0
    #allocation3 [shape = 'u8[65536]{0}', space=vmem, size = 0x10000, scoped, tag = 'input window, operand 0']
    #allocation4 [shape = 's32[2]{0}', space=sflag, size = 0x8, scoped, tag = 'scoped memory for tpu_custom_call.1']
    #allocation5 [shape = 's32[2]{0}', space=sflag, size = 0x8, scoped, tag = 'scoped memory for tpu_custom_call.1']
    #allocation6 [shape = 'u8[65536]{0}', space=vmem, size = 0x10000, scoped, tag = 'input window, operand 4, single buffered']
    #allocation7 [shape = 's32[1]{0}', space=sflag, size = 0x4, scoped, tag = 'scoped memory for tpu_custom_call.1']
    #allocation8 [shape = 'u8[262144]{0}', space=vmem, size = 0x40000, scoped, tag = 'output window, operand 0']
    %12 = vsyncpa [#allocation4], 0
    %s13 = scalar_lea.sflag [#allocation4], 1
    %14 = vsyncpa %s13, 0
    %15 = vsyncpa [#allocation7], 0
    %16 = vsyncpa [#allocation5], 0
    %s17 = scalar_lea.sflag [#allocation5], 1
    %18 = vsyncpa %s17, 0
    loop: start=0, step=1, limit=4
    $region2: #{tpu_custom_call.1} parent=1 // loop_pre_header
      _
    $region3: #{tpu_custom_call.1} parent=1 // loop_header
      %s20 = sphi 0, %s24
      %p21 = scmp.ge.s32.totalorder %s20, 4
      %s27 = sphi 0, %s39
      %s28 = sphi 0, %s35
      %s29 = sphi 0, %s27
      %s30 = sphi 0, %s28
      %s31 = sphi 0, %s29
      %s32 = sphi 0, %s30
      %s42 = sphi 0, %s44
      %s45 = sphi 0, %s42
      %s46 = sphi 0, %s45
      %s62 = sphi 0, %s46
      %s66 = sphi 0, %s66
      %s68 = sphi 0, %s66
      %s69 = sphi 0, %s68
      %s83 = sphi 0, %s69
      %s87 = sphi 0, %s87
      %s89 = sphi 0, %s87
      %s90 = sphi 0, %s89
      %s104 = sphi 0, %s90
      %s108 = sphi 0, %s108
      %s110 = sphi 0, %s108
      %s111 = sphi 0, %s110
      %s125 = sphi 0, %s111
      %s129 = sphi 0, %s129
      %s131 = sphi 0, %s129
      %s132 = sphi 0, %s131
      %s146 = sphi 0, %s132
      %s150 = sphi 0, %s150
      %s152 = sphi 0, %s150
      %s153 = sphi 0, %s152
      %s167 = sphi 0, %s153
      %s173 = sphi 0, %s175
      %s176 = sphi 0, %s173
      %s177 = sphi 0, %s176
      %s193 = sphi 0, %s177
      %s201 = sphi 0, %s203
      %s204 = sphi 0, %s201
      %s205 = sphi 0, %s204
      %s221 = sphi 0, %s205
    $region4: #{tpu_custom_call.1} parent=1 // loop_header_branch
      %23 = sbr.rel (%p21) target = $region8
    $region5: #{tpu_custom_call.1} parent=1 // loop_body
      %s25 = ssub.s32 %s20, 1
      %s26 = ssub.s32 %s20, 2
      %s33 = sadd.s32 1, %s28
      %p34 = scmp.ge.s32.totalorder %s33, 1
      %s35 = scalar_select %p34, 0, %s33
      %s36 = sadd.s32 1, %s27
      %s37 = scalar_select %p34, %s36, %s27
      %p38 = scmp.ge.s32.totalorder %s37, 2
      %s39 = scalar_select %p38, 0, %s37
      %s40 = ssub.s32 %s27, %s39
      %p41 = scmp.eq.s32.totalorder %s40, 0
      %s43 = sadd.s32 %s42, 1
      %s44 = scalar_select %p41, %s42, %s43
      %p47 = pneg %p41
      %p48 = scmp.eq.s32.totalorder %s20, 1
      %p49 = por %p47, %p48
      %p50 = scmp.ne.s32.totalorder %s42, %s45
      %p51 = scmp.eq.s32.totalorder %s20, 0
      %p52 = por %p50, %p51
      %p53 = scmp.ne.s32.totalorder %s42, %s45
      %p54 = scmp.eq.s32.totalorder %s25, 1
      %p55 = por %p53, %p54
      %p56 = scmp.ne.s32.totalorder %s45, %s46
      %p57 = scmp.eq.s32.totalorder %s25, 0
      %p58 = por %p56, %p57
      %p59 = scmp.ne.s32.totalorder %s45, %s46
      %p60 = scmp.eq.s32.totalorder %s26, 1
      %p61 = por %p59, %p60
      %p63 = scmp.ne.s32.totalorder %s46, %s62
      %p64 = scmp.eq.s32.totalorder %s26, 0
      %p65 = por %p63, %p64
      %s67 = sadd.s32 %s66, 1
      %p70 = scmp.eq.s32.totalorder %s20, 1
      %p71 = scmp.ne.s32.totalorder %s66, %s68
      %p72 = scmp.eq.s32.totalorder %s20, 0
      %p73 = por %p71, %p72
      %p74 = scmp.ne.s32.totalorder %s66, %s68
      %p75 = scmp.eq.s32.totalorder %s25, 1
      %p76 = por %p74, %p75
      %p77 = scmp.ne.s32.totalorder %s68, %s69
      %p78 = scmp.eq.s32.totalorder %s25, 0
      %p79 = por %p77, %p78
      %p80 = scmp.ne.s32.totalorder %s68, %s69
      %p81 = scmp.eq.s32.totalorder %s26, 1
      %p82 = por %p80, %p81
      %p84 = scmp.ne.s32.totalorder %s69, %s83
      %p85 = scmp.eq.s32.totalorder %s26, 0
      %p86 = por %p84, %p85
      %s88 = sadd.s32 %s87, 1
      %p91 = scmp.eq.s32.totalorder %s20, 1
      %p92 = scmp.ne.s32.totalorder %s87, %s89
      %p93 = scmp.eq.s32.totalorder %s20, 0
      %p94 = por %p92, %p93
      %p95 = scmp.ne.s32.totalorder %s87, %s89
      %p96 = scmp.eq.s32.totalorder %s25, 1
      %p97 = por %p95, %p96
      %p98 = scmp.ne.s32.totalorder %s89, %s90
      %p99 = scmp.eq.s32.totalorder %s25, 0
      %p100 = por %p98, %p99
      %p101 = scmp.ne.s32.totalorder %s89, %s90
      %p102 = scmp.eq.s32.totalorder %s26, 1
      %p103 = por %p101, %p102
      %p105 = scmp.ne.s32.totalorder %s90, %s104
      %p106 = scmp.eq.s32.totalorder %s26, 0
      %p107 = por %p105, %p106
      %s109 = sadd.s32 %s108, 1
      %p112 = scmp.eq.s32.totalorder %s20, 1
      %p113 = scmp.ne.s32.totalorder %s108, %s110
      %p114 = scmp.eq.s32.totalorder %s20, 0
      %p115 = por %p113, %p114
      %p116 = scmp.ne.s32.totalorder %s108, %s110
      %p117 = scmp.eq.s32.totalorder %s25, 1
      %p118 = por %p116, %p117
      %p119 = scmp.ne.s32.totalorder %s110, %s111
      %p120 = scmp.eq.s32.totalorder %s25, 0
      %p121 = por %p119, %p120
      %p122 = scmp.ne.s32.totalorder %s110, %s111
      %p123 = scmp.eq.s32.totalorder %s26, 1
      %p124 = por %p122, %p123
      %p126 = scmp.ne.s32.totalorder %s111, %s125
      %p127 = scmp.eq.s32.totalorder %s26, 0
      %p128 = por %p126, %p127
      %s130 = sadd.s32 %s129, 1
      %p133 = scmp.eq.s32.totalorder %s20, 1
      %p134 = scmp.ne.s32.totalorder %s129, %s131
      %p135 = scmp.eq.s32.totalorder %s20, 0
      %p136 = por %p134, %p135
      %p137 = scmp.ne.s32.totalorder %s129, %s131
      %p138 = scmp.eq.s32.totalorder %s25, 1
      %p139 = por %p137, %p138
      %p140 = scmp.ne.s32.totalorder %s131, %s132
      %p141 = scmp.eq.s32.totalorder %s25, 0
      %p142 = por %p140, %p141
      %p143 = scmp.ne.s32.totalorder %s131, %s132
      %p144 = scmp.eq.s32.totalorder %s26, 1
      %p145 = por %p143, %p144
      %p147 = scmp.ne.s32.totalorder %s132, %s146
      %p148 = scmp.eq.s32.totalorder %s26, 0
      %p149 = por %p147, %p148
      %s151 = sadd.s32 %s150, 1
      %p154 = scmp.eq.s32.totalorder %s20, 1
      %p155 = scmp.ne.s32.totalorder %s150, %s152
      %p156 = scmp.eq.s32.totalorder %s20, 0
      %p157 = por %p155, %p156
      %p158 = scmp.ne.s32.totalorder %s150, %s152
      %p159 = scmp.eq.s32.totalorder %s25, 1
      %p160 = por %p158, %p159
      %p161 = scmp.ne.s32.totalorder %s152, %s153
      %p162 = scmp.eq.s32.totalorder %s25, 0
      %p163 = por %p161, %p162
      %p164 = scmp.ne.s32.totalorder %s152, %s153
      %p165 = scmp.eq.s32.totalorder %s26, 1
      %p166 = por %p164, %p165
      %p168 = scmp.ne.s32.totalorder %s153, %s167
      %p169 = scmp.eq.s32.totalorder %s26, 0
      %p170 = por %p168, %p169
      %s171 = ssub.s32 %s28, %s35
      %p172 = scmp.eq.s32.totalorder %s171, 0
      %s174 = sadd.s32 %s173, 1
      %s175 = scalar_select %p172, %s173, %s174
      %p178 = pneg %p172
      %p179 = scmp.eq.s32.totalorder %s20, 1
      %p180 = por %p178, %p179
      %p181 = scmp.ne.s32.totalorder %s173, %s176
      %p182 = scmp.eq.s32.totalorder %s20, 0
      %p183 = por %p181, %p182
      %p184 = scmp.ne.s32.totalorder %s173, %s176
      %p185 = scmp.eq.s32.totalorder %s25, 1
      %p186 = por %p184, %p185
      %p187 = scmp.ne.s32.totalorder %s176, %s177
      %p188 = scmp.eq.s32.totalorder %s25, 0
      %p189 = por %p187, %p188
      %p190 = scmp.ne.s32.totalorder %s176, %s177
      %p191 = scmp.eq.s32.totalorder %s26, 1
      %p192 = por %p190, %p191
      %p194 = scmp.ne.s32.totalorder %s177, %s193
      %p195 = scmp.eq.s32.totalorder %s26, 0
      %p196 = por %p194, %p195
      %s197 = ssub.s32 %s27, %s39
      %s198 = ssub.s32 %s28, %s35
      %s199 = sor.u32 %s197, %s198
      %p200 = scmp.eq.s32.totalorder %s199, 0
      %s202 = sadd.s32 %s201, 1
      %s203 = scalar_select %p200, %s201, %s202
      %p206 = pneg %p200
      %p207 = scmp.eq.s32.totalorder %s20, 1
      %p208 = por %p206, %p207
      %p209 = scmp.ne.s32.totalorder %s201, %s204
      %p210 = scmp.eq.s32.totalorder %s20, 0
      %p211 = por %p209, %p210
      %p212 = scmp.ne.s32.totalorder %s201, %s204
      %p213 = scmp.eq.s32.totalorder %s25, 1
      %p214 = por %p212, %p213
      %p215 = scmp.ne.s32.totalorder %s204, %s205
      %p216 = scmp.eq.s32.totalorder %s25, 0
      %p217 = por %p215, %p216
      %p218 = scmp.ne.s32.totalorder %s204, %s205
      %p219 = scmp.eq.s32.totalorder %s26, 1
      %p220 = por %p218, %p219
      %p222 = scmp.ne.s32.totalorder %s205, %s221
      %p223 = scmp.eq.s32.totalorder %s26, 0
      %p224 = por %p222, %p223
      %p225 = scmp.le.s32.totalorder 1, %s20
      %p226 = scmp.lt.s32.totalorder %s20, 3
      %p227 = pnand %p225, %p226
      %p228 = pneg %p227
      // Predicated region
      $region9: #{tpu_custom_call.1} parent=5 // pred_check
        _
      $region10: #{tpu_custom_call.1} parent=5 // pred_check_branch
        %230 = sbr.rel (%p227) target = $region12
      $region11: #{tpu_custom_call.1} parent=5 // pred_region
        %s231 = ssub.s32 %s20, 1
        // Predicated region
        $region13: #{tpu_custom_call.1} parent=11 // pred_check
          %p232 = pneg %p79
        $region14: #{tpu_custom_call.1} parent=11 // pred_check_branch
          %234 = sbr.rel (%p232) target = $region16
        $region15: #{tpu_custom_call.1} parent=11 // pred_region
          _
        $region16: #{tpu_custom_call.1} parent=11 // pred_fallthru
          _
        // Predicated region
        $region17: #{tpu_custom_call.1} parent=11 // pred_check
          %p235 = pneg %p100
        $region18: #{tpu_custom_call.1} parent=11 // pred_check_branch
          %237 = sbr.rel (%p235) target = $region20
        $region19: #{tpu_custom_call.1} parent=11 // pred_region
          _
        $region20: #{tpu_custom_call.1} parent=11 // pred_fallthru
          _
        // Predicated region
        $region21: #{tpu_custom_call.1} parent=11 // pred_check
          %p238 = pneg %p121
        $region22: #{tpu_custom_call.1} parent=11 // pred_check_branch
          %240 = sbr.rel (%p238) target = $region24
        $region23: #{tpu_custom_call.1} parent=11 // pred_region
          _
        $region24: #{tpu_custom_call.1} parent=11 // pred_fallthru
          _
        // Predicated region
        $region25: #{tpu_custom_call.1} parent=11 // pred_check
          %p241 = pneg %p142
        $region26: #{tpu_custom_call.1} parent=11 // pred_check_branch
          %243 = sbr.rel (%p241) target = $region28
        $region27: #{tpu_custom_call.1} parent=11 // pred_region
          %s245 = ssub.s32 2048, 2048
          %246 = vsyncadd [#allocation7], %s245
          %s247 = sshll.u32 [#allocation6], 4
          %s248 = int_to_ptr.vmem [resolvable:$true] %s247
          %253 = dma.hbm_to_vmem [thread:$0]  %s4, 2048, %s248, [#allocation7], 64, 64, 4
        $region28: #{tpu_custom_call.1} parent=11 // pred_fallthru
          _
        // Predicated region
        $region29: #{tpu_custom_call.1} parent=11 // pred_check
          %p254 = pneg %p163
        $region30: #{tpu_custom_call.1} parent=11 // pred_check_branch
          %256 = sbr.rel (%p254) target = $region32
        $region31: #{tpu_custom_call.1} parent=11 // pred_region
          _
        $region32: #{tpu_custom_call.1} parent=11 // pred_fallthru
          _
        // Predicated region
        $region33: #{tpu_custom_call.1} parent=11 // pred_check
          %p257 = pneg %p189
        $region34: #{tpu_custom_call.1} parent=11 // pred_check_branch
          %259 = sbr.rel (%p257) target = $region36
        $region35: #{tpu_custom_call.1} parent=11 // pred_region
          %s260 = smul.u32 32, %s30
          %p261 = scmp.lt.s32.totalorder %s260, 31
          %s262 = scalar_select %p261, %s260, 31
          %s263 = smul.addr %s262, 4
          %s264 = scalar_lea.vmem %s6, %s263
          %s265 = smul.u32 32, %s30
        $region36: #{tpu_custom_call.1} parent=11 // pred_fallthru
          _
      $region12: #{tpu_custom_call.1} parent=5 // pred_fallthru
        _
      %p266 = scmp.lt.s32.totalorder %s20, 2
      // Predicated region
      $region37: #{tpu_custom_call.1} parent=5 // pred_check
        %p267 = pneg %p266
      $region38: #{tpu_custom_call.1} parent=5 // pred_check_branch
        %269 = sbr.rel (%p267) target = $region40
      $region39: #{tpu_custom_call.1} parent=5 // pred_region
        // Predicated region
        $region41: #{tpu_custom_call.1} parent=39 // pred_check
          %p270 = pneg %p52
        $region42: #{tpu_custom_call.1} parent=39 // pred_check_branch
          %272 = sbr.rel (%p270) target = $region44
        $region43: #{tpu_custom_call.1} parent=39 // pred_region
          %s273 = sand.u32 %s42, 1
          %s274 = scalar_lea.sflag [#allocation4], %s273
          %s275 = sand.u32 %s42, 1
          %s276 = smul.addr %s275, 64
          %s277 = scalar_lea.vmem [#allocation3], %s276
          %s279 = ssub.s32 1024, 1024
          %280 = vsyncadd %s274, %s279
          %s281 = smul.addr %s27, 16
          %s282 = smul.addr %s281, 64
          %s283 = scalar_lea.hbm %s0, %s282
          %s284 = sshll.u32 %s277, 4
          %s285 = int_to_ptr.vmem [resolvable:$true] %s284
          %290 = dma.hbm_to_vmem [thread:$0]  %s283, 1024, %s285, %s274, 128, 128, 8
        $region44: #{tpu_custom_call.1} parent=39 // pred_fallthru
          _
      $region40: #{tpu_custom_call.1} parent=5 // pred_fallthru
        _
      %p291 = scmp.le.s32.totalorder 1, %s20
      %p292 = scmp.lt.s32.totalorder %s20, 3
      %p293 = pnand %p291, %p292
      %p294 = pneg %p293
      // Predicated region
      $region45: #{tpu_custom_call.1} parent=5 // pred_check
        _
      $region46: #{tpu_custom_call.1} parent=5 // pred_check_branch
        %296 = sbr.rel (%p293) target = $region48
      $region47: #{tpu_custom_call.1} parent=5 // pred_region
        %s297 = ssub.s32 %s20, 1
        %s298 = sand.u32 %s45, 1
        %s299 = scalar_lea.sflag [#allocation4], %s298
        %s300 = sand.u32 %s45, 1
        %s301 = smul.addr %s300, 64
        %s302 = scalar_lea.vmem [#allocation3], %s301
        // Predicated region
        $region49: #{tpu_custom_call.1} parent=47 // pred_check
          %p303 = pneg %p58
        $region50: #{tpu_custom_call.1} parent=47 // pred_check_branch
          %305 = sbr.rel (%p303) target = $region52
        $region51: #{tpu_custom_call.1} parent=47 // pred_region
          %306 = dma.done %s299, 1024
        $region52: #{tpu_custom_call.1} parent=47 // pred_fallthru
          _
        // Predicated region
        $region53: #{tpu_custom_call.1} parent=47 // pred_check
          %p307 = pneg %p142
        $region54: #{tpu_custom_call.1} parent=47 // pred_check_branch
          %309 = sbr.rel (%p307) target = $region56
        $region55: #{tpu_custom_call.1} parent=47 // pred_region
          %310 = dma.done [#allocation7], 2048
        $region56: #{tpu_custom_call.1} parent=47 // pred_fallthru
          _
        %s311 = sand.u32 %s45, 1
        %s312 = scalar_lea.sflag [#allocation4], %s311
        %s313 = sand.u32 %s45, 1
        %s314 = smul.addr %s313, 64
        %s315 = scalar_lea.vmem [#allocation3], %s314
        %p316 = pneg %p58
        %p317 = pneg %p55
        %p318 = pneg %p79
        %p319 = pneg %p76
        %p320 = pneg %p100
        %p321 = pneg %p97
        %p322 = pneg %p121
        %p323 = pneg %p118
        %p324 = pneg %p142
        %p325 = pneg %p139
        %p326 = pneg %p163
        %p327 = pneg %p160
        %s328 = smul.u32 32, %s30
        %p329 = scmp.lt.s32.totalorder %s328, 31
        %s330 = scalar_select %p329, %s328, 31
        %s331 = smul.addr %s330, 4
        %s332 = scalar_lea.vmem %s6, %s331
        %p333 = pneg %p189
        %p334 = pneg %p186
        %p335 = pneg %p217
        %p336 = pneg %p214
        %s337 = sand.u32 %s204, 1
        %s338 = scalar_lea.sflag [#allocation5], %s337
        %s339 = sand.u32 %s204, 1
        %s340 = smul.addr %s339, 256
        %s341 = scalar_lea.vmem [#allocation8], %s340
        %s342 = smul.u32 32, %s30
        %p343 = scmp.lt.s32.totalorder %s342, 31
        %s344 = scalar_select %p343, %s342, 31
        %s345 = smul.addr %s344, 4
        %s346 = scalar_lea.vmem %s6, %s345
        %s347 = smul.u32 32, %s30
        %s348 = smul.u32 32, %s30
        %p350 = scmp.eq.s32.totalorder %s30, 0
        // Predicated region
        $region57: #{tpu_custom_call.1} parent=47 // pred_check
          %p351 = pneg %p350
        $region58: #{tpu_custom_call.1} parent=47 // pred_check_branch
          %353 = sbr.rel (%p351) target = $region60
        $region59: #{tpu_custom_call.1} parent=47 // pred_region
          %v354 = vld [vmem:[%s302] sm:$0xff]
          %v355 = vld [vmem:[%s302 + $0x8] sm:$0xff]
          %v356 = vld [vmem:[%s302 + $0x10] sm:$0xff]
          %v357 = vld [vmem:[%s302 + $0x18] sm:$0xff]
          %v358 = vld [vmem:[%s302 + $0x20] sm:$0xff]
          %v359 = vld [vmem:[%s302 + $0x28] sm:$0xff]
          %v360 = vld [vmem:[%s302 + $0x30] sm:$0xff]
          %v361 = vld [vmem:[%s302 + $0x38] sm:$0xff]
          %v362 = vld [vmem:[%s1] sm:$0xff]
          %v363 = vld [vmem:[%s1 + $0x8] sm:$0xff]
          %v364 = vld [vmem:[%s1 + $0x10] sm:$0xff]
          %v365 = vld [vmem:[%s1 + $0x18] sm:$0xff]
          %v366 = vld [vmem:[%s1 + $0x20] sm:$0xff]
          %v367 = vld [vmem:[%s1 + $0x28] sm:$0xff]
          %v368 = vld [vmem:[%s1 + $0x30] sm:$0xff]
          %v369 = vld [vmem:[%s1 + $0x38] sm:$0xff]
          %v370 = vld [vmem:[%s1 + $0x40] sm:$0xff]
          %v371 = vld [vmem:[%s1 + $0x48] sm:$0xff]
          %v372 = vld [vmem:[%s1 + $0x50] sm:$0xff]
          %v373 = vld [vmem:[%s1 + $0x58] sm:$0xff]
          %v374 = vld [vmem:[%s1 + $0x60] sm:$0xff]
          %v375 = vld [vmem:[%s1 + $0x68] sm:$0xff]
          %v376 = vld [vmem:[%s1 + $0x70] sm:$0xff]
          %v377 = vld [vmem:[%s1 + $0x78] sm:$0xff]
          %v378 = vld [vmem:[%s1 + $0x80] sm:$0xff]
          %v379 = vld [vmem:[%s1 + $0x88] sm:$0xff]
          %v388 = vunpack.c.l.b16 %v354
          %v389 = vunpack.c.h.b16 %v354
          %v390 = vunpack.c.l.b16 %v355
          %v391 = vunpack.c.h.b16 %v355
          %v392 = vunpack.c.l.b16 %v356
          %v393 = vunpack.c.h.b16 %v356
          %v394 = vunpack.c.l.b16 %v357
          %v395 = vunpack.c.h.b16 %v357
          %v396 = vunpack.c.l.b16 %v358
          %v397 = vunpack.c.h.b16 %v358
          %v398 = vunpack.c.l.b16 %v359
          %v399 = vunpack.c.h.b16 %v359
          %v400 = vunpack.c.l.b16 %v360
          %v401 = vunpack.c.h.b16 %v360
          %v402 = vunpack.c.l.b16 %v361
          %v403 = vunpack.c.h.b16 %v361
          %v404 = vpack.c.b16 %v390, %v388
          %v405 = vpack.c.b16 %v391, %v389
          %v406 = vpack.c.b16 %v394, %v392
          %v407 = vpack.c.b16 %v395, %v393
          %v408 = vpack.c.b16 %v398, %v396
          %v409 = vpack.c.b16 %v399, %v397
          %v410 = vpack.c.b16 %v402, %v400
          %v411 = vpack.c.b16 %v403, %v401
          %v434 = vunpack.c.l.b16 %v362
          %v435 = vunpack.c.h.b16 %v362
          %v436 = vunpack.c.l.b16 %v363
          %v437 = vunpack.c.h.b16 %v363
          %v438 = vunpack.c.l.b16 %v364
          %v439 = vunpack.c.h.b16 %v364
          %v440 = vunpack.c.l.b16 %v365
          %v441 = vunpack.c.h.b16 %v365
          %v442 = vunpack.c.l.b16 %v366
          %v443 = vunpack.c.h.b16 %v366
          %v444 = vunpack.c.l.b16 %v367
          %v445 = vunpack.c.h.b16 %v367
          %v446 = vunpack.c.l.b16 %v368
          %v447 = vunpack.c.h.b16 %v368
          %v448 = vunpack.c.l.b16 %v369
          %v449 = vunpack.c.h.b16 %v369
          %v450 = vunpack.c.l.b16 %v370
          %v451 = vunpack.c.h.b16 %v370
          %v452 = vunpack.c.l.b16 %v371
          %v453 = vunpack.c.h.b16 %v371
          %v454 = vunpack.c.l.b16 %v372
          %v455 = vunpack.c.h.b16 %v372
          %v456 = vunpack.c.l.b16 %v373
          %v457 = vunpack.c.h.b16 %v373
          %v458 = vunpack.c.l.b16 %v374
          %v459 = vunpack.c.h.b16 %v374
          %v460 = vunpack.c.l.b16 %v375
          %v461 = vunpack.c.h.b16 %v375
          %v462 = vunpack.c.l.b16 %v376
          %v463 = vunpack.c.h.b16 %v376
          %v464 = vunpack.c.l.b16 %v377
          %v465 = vunpack.c.h.b16 %v377
          %v466 = vunpack.c.l.b16 %v378
          %v467 = vunpack.c.h.b16 %v378
          %v468 = vunpack.c.l.b16 %v379
          %v469 = vunpack.c.h.b16 %v379
          %v470 = vpack.c.b16 %v436, %v434
          %v471 = vpack.c.b16 %v437, %v435
          %v472 = vpack.c.b16 %v440, %v438
          %v473 = vpack.c.b16 %v441, %v439
          %v474 = vpack.c.b16 %v444, %v442
          %v475 = vpack.c.b16 %v445, %v443
          %v476 = vpack.c.b16 %v448, %v446
          %v477 = vpack.c.b16 %v449, %v447
          %v478 = vpack.c.b16 %v452, %v450
          %v479 = vpack.c.b16 %v453, %v451
          %v480 = vpack.c.b16 %v456, %v454
          %v481 = vpack.c.b16 %v457, %v455
          %v482 = vpack.c.b16 %v460, %v458
          %v483 = vpack.c.b16 %v461, %v459
          %v484 = vpack.c.b16 %v464, %v462
          %v485 = vpack.c.b16 %v465, %v463
          %v486 = vpack.c.b16 %v468, %v466
          %v487 = vpack.c.b16 %v469, %v467
          %vm506 = vcmask 130048
          %v508 = vsel %vm506, %v405, 0
          %v511 = vsel %vm506, %v407, 0
          %v514 = vsel %vm506, %v409, 0
          %v517 = vsel %vm506, %v411, 0
          %519 = vmatprep.subr.bf16.mxu0 %v471
          %520 = vmatpush1.bf16.msra.mxu0 %v470
          %521 = vmatprep.subr.bf16.mxu0 %v473
          %522 = vmatpush1.bf16.msra.mxu0 %v472
          %523 = vmatprep.subr.bf16.mxu0 %v475
          %524 = vmatpush1.bf16.msra.mxu0 %v474
          %525 = vmatprep.subr.bf16.mxu0 %v477
          %526 = vmatpush1.bf16.msra.mxu0 %v476
          %527 = vmatprep.subr.bf16.mxu0 %v479
          %528 = vmatpush1.bf16.msra.mxu0 %v478
          %529 = vmatprep.subr.bf16.mxu0 %v481
          %530 = vmatpush1.bf16.msra.mxu0 %v480
          %531 = vmatprep.subr.bf16.mxu0 %v483
          %532 = vmatpush1.bf16.msra.mxu0 %v482
          %533 = vmatprep.subr.bf16.mxu0 %v485
          %534 = vmatpush1.bf16.msra.mxu0 %v484
          %535 = vmatprep.subr.bf16.mxu0 %v487
          %536 = vmatpush1.bf16.msra.mxu0 %v486
          %537 = vmatprep.subr.bf16.mxu0 0
          %538 = vmatpush1.bf16.msra.mxu0 0
          %539 = vmatprep.subr.bf16.mxu0 0
          %540 = vmatpush1.bf16.msra.mxu0 0
          %541 = vmatprep.subr.bf16.mxu0 0
          %542 = vmatpush1.bf16.msra.mxu0 0
          %543 = vmatprep.subr.bf16.mxu0 0
          %544 = vmatpush1.bf16.msra.mxu0 0
          %545 = vmatprep.subr.bf16.mxu0 0
          %546 = vmatpush1.bf16.msra.mxu0 0
          %547 = vmatprep.subr.bf16.mxu0 0
          %548 = vmatpush1.bf16.msra.mxu0 0
          %549 = vmatprep.subr.bf16.mxu0 0
          %550 = vmatpush1.bf16.msra.mxu0 0
          %551 = vmatprep.mubr.bf16.mxu0 %v508
          %552 = vmatmul.mubr.bf16.gmra.mrb[0].mxu0 %v404
          %v553 = vpop.f32.mrb[0].mxu0
          %v554 = vadd.f32 0.0, %v553
          %v555 = vpop.f32.mrb[0].mxu0
          %v556 = vadd.f32 0.0, %v555
          %v557 = vpop.f32.mrb[0].mxu0
          %v558 = vadd.f32 0.0, %v557
          %v559 = vpop.f32.mrb[0].mxu0
          %v560 = vadd.f32 0.0, %v559
          %561 = vmatprep.mubr.bf16.mxu0 %v511
          %562 = vmatmul.mubr.bf16.gmra.mrb[0].mxu0 %v406
          %v563 = vpop.f32.mrb[0].mxu0
          %v564 = vadd.f32 0.0, %v563
          %v565 = vpop.f32.mrb[0].mxu0
          %v566 = vadd.f32 0.0, %v565
          %v567 = vpop.f32.mrb[0].mxu0
          %v568 = vadd.f32 0.0, %v567
          %v569 = vpop.f32.mrb[0].mxu0
          %v570 = vadd.f32 0.0, %v569
          %571 = vmatprep.mubr.bf16.mxu0 %v514
          %572 = vmatmul.mubr.bf16.gmra.mrb[0].mxu0 %v408
          %v573 = vpop.f32.mrb[0].mxu0
          %v574 = vadd.f32 0.0, %v573
          %v575 = vpop.f32.mrb[0].mxu0
          %v576 = vadd.f32 0.0, %v575
          %v577 = vpop.f32.mrb[0].mxu0
          %v578 = vadd.f32 0.0, %v577
          %v579 = vpop.f32.mrb[0].mxu0
          %v580 = vadd.f32 0.0, %v579
          %581 = vmatprep.mubr.bf16.mxu0 %v517
          %582 = vmatmul.mubr.bf16.gmra.mrb[0].mxu0 %v410
          %v583 = vpop.f32.mrb[0].mxu0
          %v584 = vadd.f32 0.0, %v583
          %v585 = vpop.f32.mrb[0].mxu0
          %v586 = vadd.f32 0.0, %v585
          %v587 = vpop.f32.mrb[0].mxu0
          %v588 = vadd.f32 0.0, %v587
          %v589 = vpop.f32.mrb[0].mxu0
          %v590 = vadd.f32 0.0, %v589
          %591 = vdwg.mxu0
          %v592 = vld [vmem:[%s2] sm:$0x3]
          %v594 = vlaneseq
          %v595 = vshrl.u32 %v594, 7
          %v596 = vsub.s32 0, %v595
          %v597 = vrot.slane %v592, %v596
          %v598 = vlaneseq
          %v599 = vshrl.u32 %v598, 7
          %v600 = vsub.s32 1, %v599
          %v601 = vrot.slane %v592, %v600
          %v604 = vmul.f32 %v554, %v597
          %v605 = vmul.f32 %v556, %v601
          %v606 = vmul.f32 %v558, %v597
          %v607 = vmul.f32 %v560, %v601
          %v608 = vmul.f32 %v564, %v597
          %v609 = vmul.f32 %v566, %v601
          %v610 = vmul.f32 %v568, %v597
          %v611 = vmul.f32 %v570, %v601
          %v612 = vmul.f32 %v574, %v597
          %v613 = vmul.f32 %v576, %v601
          %v614 = vmul.f32 %v578, %v597
          %v615 = vmul.f32 %v580, %v601
          %v616 = vmul.f32 %v584, %v597
          %v617 = vmul.f32 %v586, %v601
          %v618 = vmul.f32 %v588, %v597
          %v619 = vmul.f32 %v590, %v601
          %v620 = vld [vmem:[%s3] sm:$0x3]
          %v622 = vlaneseq
          %v623 = vshrl.u32 %v622, 7
          %v624 = vsub.s32 0, %v623
          %v625 = vrot.slane %v620, %v624
          %v626 = vlaneseq
          %v627 = vshrl.u32 %v626, 7
          %v628 = vsub.s32 1, %v627
          %v629 = vrot.slane %v620, %v628
          %v632 = vadd.f32 %v604, %v625
          %v633 = vadd.f32 %v605, %v629
          %v634 = vadd.f32 %v606, %v625
          %v635 = vadd.f32 %v607, %v629
          %v636 = vadd.f32 %v608, %v625
          %v637 = vadd.f32 %v609, %v629
          %v638 = vadd.f32 %v610, %v625
          %v639 = vadd.f32 %v611, %v629
          %v640 = vadd.f32 %v612, %v625
          %v641 = vadd.f32 %v613, %v629
          %v642 = vadd.f32 %v614, %v625
          %v643 = vadd.f32 %v615, %v629
          %v644 = vadd.f32 %v616, %v625
          %v645 = vadd.f32 %v617, %v629
          %v646 = vadd.f32 %v618, %v625
          %v647 = vadd.f32 %v619, %v629
          %v648 = vmax.f32 %v632, 0.0
          %v649 = vmax.f32 %v633, 0.0
          %v650 = vmax.f32 %v634, 0.0
          %v651 = vmax.f32 %v635, 0.0
          %v652 = vmax.f32 %v636, 0.0
          %v653 = vmax.f32 %v637, 0.0
          %v654 = vmax.f32 %v638, 0.0
          %v655 = vmax.f32 %v639, 0.0
          %v656 = vmax.f32 %v640, 0.0
          %v657 = vmax.f32 %v641, 0.0
          %v658 = vmax.f32 %v642, 0.0
          %v659 = vmax.f32 %v643, 0.0
          %v660 = vmax.f32 %v644, 0.0
          %v661 = vmax.f32 %v645, 0.0
          %v662 = vmax.f32 %v646, 0.0
          %v663 = vmax.f32 %v647, 0.0
          %v664 = vpack.c.bf16 %v650, %v648
          %v665 = vpack.c.bf16 %v651, %v649
          %v666 = vpack.c.bf16 %v654, %v652
          %v667 = vpack.c.bf16 %v655, %v653
          %v668 = vpack.c.bf16 %v658, %v656
          %v669 = vpack.c.bf16 %v659, %v657
          %v670 = vpack.c.bf16 %v662, %v660
          %v671 = vpack.c.bf16 %v663, %v661
          %v672 = vld [vmem:[#allocation6] sm:$0xf]
          %v673 = vld [vmem:[#allocation6 + $0x4] sm:$0xf]
          %v674 = vld [vmem:[#allocation6 + $0x8] sm:$0xf]
          %v675 = vld [vmem:[#allocation6 + $0xc] sm:$0xf]
          %v676 = vld [vmem:[#allocation6 + $0x10] sm:$0xf]
          %v677 = vld [vmem:[#allocation6 + $0x14] sm:$0xf]
          %v678 = vld [vmem:[#allocation6 + $0x18] sm:$0xf]
          %v679 = vld [vmem:[#allocation6 + $0x1c] sm:$0xf]
          %v680 = vld [vmem:[#allocation6 + $0x20] sm:$0xf]
          %v681 = vld [vmem:[#allocation6 + $0x24] sm:$0xf]
          %v682 = vld [vmem:[#allocation6 + $0x28] sm:$0xf]
          %v683 = vld [vmem:[#allocation6 + $0x2c] sm:$0xf]
          %v684 = vld [vmem:[#allocation6 + $0x30] sm:$0xf]
          %v685 = vld [vmem:[#allocation6 + $0x34] sm:$0xf]
          %v686 = vld [vmem:[#allocation6 + $0x38] sm:$0xf]
          %v687 = vld [vmem:[#allocation6 + $0x3c] sm:$0xf]
          %v688 = vld [vmem:[#allocation6 + $0x40] sm:$0xf]
          %v689 = vld [vmem:[#allocation6 + $0x44] sm:$0xf]
          %v690 = vld [vmem:[#allocation6 + $0x48] sm:$0xf]
          %v691 = vld [vmem:[#allocation6 + $0x4c] sm:$0xf]
          %v692 = vld [vmem:[#allocation6 + $0x50] sm:$0xf]
          %v693 = vld [vmem:[#allocation6 + $0x54] sm:$0xf]
          %v694 = vld [vmem:[#allocation6 + $0x58] sm:$0xf]
          %v695 = vld [vmem:[#allocation6 + $0x5c] sm:$0xf]
          %v696 = vld [vmem:[#allocation6 + $0x60] sm:$0xf]
          %v697 = vld [vmem:[#allocation6 + $0x64] sm:$0xf]
          %v698 = vld [vmem:[#allocation6 + $0x68] sm:$0xf]
          %v699 = vld [vmem:[#allocation6 + $0x6c] sm:$0xf]
          %v700 = vld [vmem:[#allocation6 + $0x70] sm:$0xf]
          %v701 = vld [vmem:[#allocation6 + $0x74] sm:$0xf]
          %v702 = vld [vmem:[#allocation6 + $0x78] sm:$0xf]
          %v703 = vld [vmem:[#allocation6 + $0x7c] sm:$0xf]
          %v704 = vld [vmem:[%s5] sm:$0x1]
          %v706 = vlaneseq
          %v707 = vshrl.u32 %v706, 7
          %v708 = vsub.s32 0, %v707
          %v709 = vrot.slane %v704, %v708
          %v743 = vunpack.c.l.b16 %v672
          %v744 = vunpack.c.l.b16 %v673
          %v745 = vunpack.c.l.b16 %v674
          %v746 = vunpack.c.l.b16 %v675
          %v747 = vunpack.c.l.b16 %v676
          %v748 = vunpack.c.l.b16 %v677
          %v749 = vunpack.c.l.b16 %v678
          %v750 = vunpack.c.l.b16 %v679
          %v751 = vunpack.c.l.b16 %v680
          %v752 = vunpack.c.l.b16 %v681
          %v753 = vunpack.c.l.b16 %v682
          %v754 = vunpack.c.l.b16 %v683
          %v755 = vunpack.c.l.b16 %v684
          %v756 = vunpack.c.l.b16 %v685
          %v757 = vunpack.c.l.b16 %v686
          %v758 = vunpack.c.l.b16 %v687
          %v759 = vunpack.c.l.b16 %v688
          %v760 = vunpack.c.l.b16 %v689
          %v761 = vunpack.c.l.b16 %v690
          %v762 = vunpack.c.l.b16 %v691
          %v763 = vunpack.c.l.b16 %v692
          %v764 = vunpack.c.l.b16 %v693
          %v765 = vunpack.c.l.b16 %v694
          %v766 = vunpack.c.l.b16 %v695
          %v767 = vunpack.c.l.b16 %v696
          %v768 = vunpack.c.l.b16 %v697
          %v769 = vunpack.c.l.b16 %v698
          %v770 = vunpack.c.l.b16 %v699
          %v771 = vunpack.c.l.b16 %v700
          %v772 = vunpack.c.l.b16 %v701
          %v773 = vunpack.c.l.b16 %v702
          %v774 = vunpack.c.l.b16 %v703
          %v775 = vpack.c.b16 %v744, %v743
          %v776 = vpack.c.b16 %v746, %v745
          %v777 = vpack.c.b16 %v748, %v747
          %v778 = vpack.c.b16 %v750, %v749
          %v779 = vpack.c.b16 %v752, %v751
          %v780 = vpack.c.b16 %v754, %v753
          %v781 = vpack.c.b16 %v756, %v755
          %v782 = vpack.c.b16 %v758, %v757
          %v783 = vpack.c.b16 %v760, %v759
          %v784 = vpack.c.b16 %v762, %v761
          %v785 = vpack.c.b16 %v764, %v763
          %v786 = vpack.c.b16 %v766, %v765
          %v787 = vpack.c.b16 %v768, %v767
          %v788 = vpack.c.b16 %v770, %v769
          %v789 = vpack.c.b16 %v772, %v771
          %v790 = vpack.c.b16 %v774, %v773
          %807 = vmatprep.subr.bf16.mxu0 0
          %808 = vmatpush1.bf16.msra.mxu0 %v775
          %809 = vmatprep.subr.bf16.mxu0 0
          %810 = vmatpush1.bf16.msra.mxu0 %v776
          %811 = vmatprep.subr.bf16.mxu0 0
          %812 = vmatpush1.bf16.msra.mxu0 %v777
          %813 = vmatprep.subr.bf16.mxu0 0
          %814 = vmatpush1.bf16.msra.mxu0 %v778
          %815 = vmatprep.subr.bf16.mxu0 0
          %816 = vmatpush1.bf16.msra.mxu0 %v779
          %817 = vmatprep.subr.bf16.mxu0 0
          %818 = vmatpush1.bf16.msra.mxu0 %v780
          %819 = vmatprep.subr.bf16.mxu0 0
          %820 = vmatpush1.bf16.msra.mxu0 %v781
          %821 = vmatprep.subr.bf16.mxu0 0
          %822 = vmatpush1.bf16.msra.mxu0 %v782
          %823 = vmatprep.subr.bf16.mxu0 0
          %824 = vmatpush1.bf16.msra.mxu0 %v783
          %825 = vmatprep.subr.bf16.mxu0 0
          %826 = vmatpush1.bf16.msra.mxu0 %v784
          %827 = vmatprep.subr.bf16.mxu0 0
          %828 = vmatpush1.bf16.msra.mxu0 %v785
          %829 = vmatprep.subr.bf16.mxu0 0
          %830 = vmatpush1.bf16.msra.mxu0 %v786
          %831 = vmatprep.subr.bf16.mxu0 0
          %832 = vmatpush1.bf16.msra.mxu0 %v787
          %833 = vmatprep.subr.bf16.mxu0 0
          %834 = vmatpush1.bf16.msra.mxu0 %v788
          %835 = vmatprep.subr.bf16.mxu0 0
          %836 = vmatpush1.bf16.msra.mxu0 %v789
          %837 = vmatprep.subr.bf16.mxu0 0
          %838 = vmatpush1.bf16.msra.mxu0 %v790
          %839 = vmatprep.mubr.bf16.mxu0 %v665
          %840 = vmatmul.mubr.bf16.gmra.mrb[0].mxu0 %v664
          %v841 = vpop.f32.mrb[0].mxu0
          %v842 = vadd.f32 %v709, %v841
          %v843 = vpop.f32.mrb[0].mxu0
          %v844 = vpop.f32.mrb[0].mxu0
          %v845 = vadd.f32 %v709, %v844
          %v846 = vpop.f32.mrb[0].mxu0
          %847 = vmatprep.mubr.bf16.mxu0 %v667
          %848 = vmatmul.mubr.bf16.gmra.mrb[0].mxu0 %v666
          %v849 = vpop.f32.mrb[0].mxu0
          %v850 = vadd.f32 %v709, %v849
          %v851 = vpop.f32.mrb[0].mxu0
          %v852 = vpop.f32.mrb[0].mxu0
          %v853 = vadd.f32 %v709, %v852
          %v854 = vpop.f32.mrb[0].mxu0
          %855 = vmatprep.mubr.bf16.mxu0 %v669
          %856 = vmatmul.mubr.bf16.gmra.mrb[0].mxu0 %v668
          %v857 = vpop.f32.mrb[0].mxu0
          %v858 = vadd.f32 %v709, %v857
          %v859 = vpop.f32.mrb[0].mxu0
          %v860 = vpop.f32.mrb[0].mxu0
          %v861 = vadd.f32 %v709, %v860
          %v862 = vpop.f32.mrb[0].mxu0
          %863 = vmatprep.mubr.bf16.mxu0 %v671
          %864 = vmatmul.mubr.bf16.gmra.mrb[0].mxu0 %v670
          %v865 = vpop.f32.mrb[0].mxu0
          %v866 = vadd.f32 %v709, %v865
          %v867 = vpop.f32.mrb[0].mxu0
          %v868 = vpop.f32.mrb[0].mxu0
          %v869 = vadd.f32 %v709, %v868
          %v870 = vpop.f32.mrb[0].mxu0
          %871 = vdwg.mxu0
          %v872 = vpack.c.bf16 %v845, %v842
          %v873 = vpack.c.bf16 %v853, %v850
          %v874 = vpack.c.bf16 %v861, %v858
          %v875 = vpack.c.bf16 %v869, %v866
          %876 = vst [vmem:[#allocation2] sm:$0xff] %v872
          %877 = vst [vmem:[#allocation2 + $0x8] sm:$0xff] %v873
          %878 = vst [vmem:[#allocation2 + $0x10] sm:$0xff] %v874
          %879 = vst [vmem:[#allocation2 + $0x18] sm:$0xff] %v875
        $region60: #{tpu_custom_call.1} parent=47 // pred_fallthru
          _
        %v880 = vld [vmem:[%s346] sm:$0xf]
        %v881 = vld [vmem:[%s346 + $0x4] sm:$0xf]
        %v882 = vld [vmem:[%s346 + $0x8] sm:$0xf]
        %v883 = vld [vmem:[%s346 + $0xc] sm:$0xf]
        %v884 = vld [vmem:[%s346 + $0x10] sm:$0xf]
        %v885 = vld [vmem:[%s346 + $0x14] sm:$0xf]
        %v886 = vld [vmem:[%s346 + $0x18] sm:$0xf]
        %v887 = vld [vmem:[%s346 + $0x1c] sm:$0xf]
        %v888 = vld [vmem:[%s346 + $0x20] sm:$0xf]
        %v889 = vld [vmem:[%s346 + $0x24] sm:$0xf]
        %v890 = vld [vmem:[%s346 + $0x28] sm:$0xf]
        %v891 = vld [vmem:[%s346 + $0x2c] sm:$0xf]
        %v892 = vld [vmem:[%s346 + $0x30] sm:$0xf]
        %v893 = vld [vmem:[%s346 + $0x34] sm:$0xf]
        %v894 = vld [vmem:[%s346 + $0x38] sm:$0xf]
        %v895 = vld [vmem:[%s346 + $0x3c] sm:$0xf]
        %v896 = vld [vmem:[%s346 + $0x40] sm:$0xf]
        %v897 = vld [vmem:[%s346 + $0x44] sm:$0xf]
        %v898 = vld [vmem:[%s346 + $0x48] sm:$0xf]
        %v899 = vld [vmem:[%s346 + $0x4c] sm:$0xf]
        %v900 = vld [vmem:[%s346 + $0x50] sm:$0xf]
        %v901 = vld [vmem:[%s346 + $0x54] sm:$0xf]
        %v902 = vld [vmem:[%s346 + $0x58] sm:$0xf]
        %v903 = vld [vmem:[%s346 + $0x5c] sm:$0xf]
        %v904 = vld [vmem:[%s346 + $0x60] sm:$0xf]
        %v905 = vld [vmem:[%s346 + $0x64] sm:$0xf]
        %v906 = vld [vmem:[%s346 + $0x68] sm:$0xf]
        %v907 = vld [vmem:[%s346 + $0x6c] sm:$0xf]
        %v908 = vld [vmem:[%s346 + $0x70] sm:$0xf]
        %v909 = vld [vmem:[%s346 + $0x74] sm:$0xf]
        %v910 = vld [vmem:[%s346 + $0x78] sm:$0xf]
        %v911 = vld [vmem:[%s346 + $0x7c] sm:$0xf]
        %v912 = vld [vmem:[#allocation2] sm:$0xff]
        %v913 = vld [vmem:[#allocation2 + $0x8] sm:$0xff]
        %v914 = vld [vmem:[#allocation2 + $0x10] sm:$0xff]
        %v915 = vld [vmem:[#allocation2 + $0x18] sm:$0xff]
        %v948 = vunpack.c.l.b16 %v880
        %v949 = vunpack.c.l.b16 %v881
        %v950 = vunpack.c.l.b16 %v882
        %v951 = vunpack.c.l.b16 %v883
        %v952 = vunpack.c.l.b16 %v884
        %v953 = vunpack.c.l.b16 %v885
        %v954 = vunpack.c.l.b16 %v886
        %v955 = vunpack.c.l.b16 %v887
        %v956 = vunpack.c.l.b16 %v888
        %v957 = vunpack.c.l.b16 %v889
        %v958 = vunpack.c.l.b16 %v890
        %v959 = vunpack.c.l.b16 %v891
        %v960 = vunpack.c.l.b16 %v892
        %v961 = vunpack.c.l.b16 %v893
        %v962 = vunpack.c.l.b16 %v894
        %v963 = vunpack.c.l.b16 %v895
        %v964 = vunpack.c.l.b16 %v896
        %v965 = vunpack.c.l.b16 %v897
        %v966 = vunpack.c.l.b16 %v898
        %v967 = vunpack.c.l.b16 %v899
        %v968 = vunpack.c.l.b16 %v900
        %v969 = vunpack.c.l.b16 %v901
        %v970 = vunpack.c.l.b16 %v902
        %v971 = vunpack.c.l.b16 %v903
        %v972 = vunpack.c.l.b16 %v904
        %v973 = vunpack.c.l.b16 %v905
        %v974 = vunpack.c.l.b16 %v906
        %v975 = vunpack.c.l.b16 %v907
        %v976 = vunpack.c.l.b16 %v908
        %v977 = vunpack.c.l.b16 %v909
        %v978 = vunpack.c.l.b16 %v910
        %v979 = vunpack.c.l.b16 %v911
        %v980 = vpack.c.b16 %v949, %v948
        %v981 = vpack.c.b16 %v951, %v950
        %v982 = vpack.c.b16 %v953, %v952
        %v983 = vpack.c.b16 %v955, %v954
        %v984 = vpack.c.b16 %v957, %v956
        %v985 = vpack.c.b16 %v959, %v958
        %v986 = vpack.c.b16 %v961, %v960
        %v987 = vpack.c.b16 %v963, %v962
        %v988 = vpack.c.b16 %v965, %v964
        %v989 = vpack.c.b16 %v967, %v966
        %v990 = vpack.c.b16 %v969, %v968
        %v991 = vpack.c.b16 %v971, %v970
        %v992 = vpack.c.b16 %v973, %v972
        %v993 = vpack.c.b16 %v975, %v974
        %v994 = vpack.c.b16 %v977, %v976
        %v995 = vpack.c.b16 %v979, %v978
        %vm996 = vcmask 523264
        %v998 = vsel %vm996, %v980, 0
        %v1001 = vsel %vm996, %v981, 0
        %v1004 = vsel %vm996, %v982, 0
        %v1007 = vsel %vm996, %v983, 0
        %v1010 = vsel %vm996, %v984, 0
        %v1013 = vsel %vm996, %v985, 0
        %v1016 = vsel %vm996, %v986, 0
        %v1019 = vsel %vm996, %v987, 0
        %v1022 = vsel %vm996, %v988, 0
        %v1025 = vsel %vm996, %v989, 0
        %v1028 = vsel %vm996, %v990, 0
        %v1031 = vsel %vm996, %v991, 0
        %v1034 = vsel %vm996, %v992, 0
        %v1037 = vsel %vm996, %v993, 0
        %v1040 = vsel %vm996, %v994, 0
        %v1043 = vsel %vm996, %v995, 0
        %1045 = vmatprep.subr.bf16.mxu0 0
        %1046 = vmatpush1.bf16.msra.mxu0 %v912
        %1047 = vmatprep.subr.bf16.mxu0 0
        %1048 = vmatpush1.bf16.msra.mxu0 %v913
        %1049 = vmatprep.subr.bf16.mxu0 0
        %1050 = vmatpush1.bf16.msra.mxu0 %v914
        %1051 = vmatprep.subr.bf16.mxu0 0
        %1052 = vmatpush1.bf16.msra.mxu0 %v915
        %1053 = vmatprep.subr.bf16.mxu0 0
        %1054 = vmatpush1.bf16.msra.mxu0 0
        %1055 = vmatprep.subr.bf16.mxu0 0
        %1056 = vmatpush1.bf16.msra.mxu0 0
        %1057 = vmatprep.subr.bf16.mxu0 0
        %1058 = vmatpush1.bf16.msra.mxu0 0
        %1059 = vmatprep.subr.bf16.mxu0 0
        %1060 = vmatpush1.bf16.msra.mxu0 0
        %1061 = vmatprep.subr.bf16.mxu0 0
        %1062 = vmatpush1.bf16.msra.mxu0 0
        %1063 = vmatprep.subr.bf16.mxu0 0
        %1064 = vmatpush1.bf16.msra.mxu0 0
        %1065 = vmatprep.subr.bf16.mxu0 0
        %1066 = vmatpush1.bf16.msra.mxu0 0
        %1067 = vmatprep.subr.bf16.mxu0 0
        %1068 = vmatpush1.bf16.msra.mxu0 0
        %1069 = vmatprep.subr.bf16.mxu0 0
        %1070 = vmatpush1.bf16.msra.mxu0 0
        %1071 = vmatprep.subr.bf16.mxu0 0
        %1072 = vmatpush1.bf16.msra.mxu0 0
        %1073 = vmatprep.subr.bf16.mxu0 0
        %1074 = vmatpush1.bf16.msra.mxu0 0
        %1075 = vmatprep.subr.bf16.mxu0 0
        %1076 = vmatpush1.bf16.msra.mxu0 0
        %1077 = vmatprep.mubr.bf16.mxu0 0
        %1078 = vmatmul.mubr.bf16.gmra.mrb[0].mxu0 %v998
        %v1079 = vpop.f32.mrb[0].mxu0
        %v1080 = vadd.f32 0.0, %v1079
        %v1081 = vpop.f32.mrb[0].mxu0
        %v1082 = vpop.f32.mrb[0].mxu0
        %v1083 = vadd.f32 0.0, %v1082
        %v1084 = vpop.f32.mrb[0].mxu0
        %1085 = vmatprep.mubr.bf16.mxu0 0
        %1086 = vmatmul.mubr.bf16.gmra.mrb[0].mxu0 %v1001
        %v1087 = vpop.f32.mrb[0].mxu0
        %v1088 = vadd.f32 0.0, %v1087
        %v1089 = vpop.f32.mrb[0].mxu0
        %v1090 = vpop.f32.mrb[0].mxu0
        %v1091 = vadd.f32 0.0, %v1090
        %v1092 = vpop.f32.mrb[0].mxu0
        %1093 = vmatprep.mubr.bf16.mxu0 0
        %1094 = vmatmul.mubr.bf16.gmra.mrb[0].mxu0 %v1004
        %v1095 = vpop.f32.mrb[0].mxu0
        %v1096 = vadd.f32 0.0, %v1095
        %v1097 = vpop.f32.mrb[0].mxu0
        %v1098 = vpop.f32.mrb[0].mxu0
        %v1099 = vadd.f32 0.0, %v1098
        %v1100 = vpop.f32.mrb[0].mxu0
        %1101 = vmatprep.mubr.bf16.mxu0 0
        %1102 = vmatmul.mubr.bf16.gmra.mrb[0].mxu0 %v1007
        %v1103 = vpop.f32.mrb[0].mxu0
        %v1104 = vadd.f32 0.0, %v1103
        %v1105 = vpop.f32.mrb[0].mxu0
        %v1106 = vpop.f32.mrb[0].mxu0
        %v1107 = vadd.f32 0.0, %v1106
        %v1108 = vpop.f32.mrb[0].mxu0
        %1109 = vmatprep.mubr.bf16.mxu0 0
        %1110 = vmatmul.mubr.bf16.gmra.mrb[0].mxu0 %v1010
        %v1111 = vpop.f32.mrb[0].mxu0
        %v1112 = vadd.f32 0.0, %v1111
        %v1113 = vpop.f32.mrb[0].mxu0
        %v1114 = vpop.f32.mrb[0].mxu0
        %v1115 = vadd.f32 0.0, %v1114
        %v1116 = vpop.f32.mrb[0].mxu0
        %1117 = vmatprep.mubr.bf16.mxu0 0
        %1118 = vmatmul.mubr.bf16.gmra.mrb[0].mxu0 %v1013
        %v1119 = vpop.f32.mrb[0].mxu0
        %v1120 = vadd.f32 0.0, %v1119
        %v1121 = vpop.f32.mrb[0].mxu0
        %v1122 = vpop.f32.mrb[0].mxu0
        %v1123 = vadd.f32 0.0, %v1122
        %v1124 = vpop.f32.mrb[0].mxu0
        %1125 = vmatprep.mubr.bf16.mxu0 0
        %1126 = vmatmul.mubr.bf16.gmra.mrb[0].mxu0 %v1016
        %v1127 = vpop.f32.mrb[0].mxu0
        %v1128 = vadd.f32 0.0, %v1127
        %v1129 = vpop.f32.mrb[0].mxu0
        %v1130 = vpop.f32.mrb[0].mxu0
        %v1131 = vadd.f32 0.0, %v1130
        %v1132 = vpop.f32.mrb[0].mxu0
        %1133 = vmatprep.mubr.bf16.mxu0 0
        %1134 = vmatmul.mubr.bf16.gmra.mrb[0].mxu0 %v1019
        %v1135 = vpop.f32.mrb[0].mxu0
        %v1136 = vadd.f32 0.0, %v1135
        %v1137 = vpop.f32.mrb[0].mxu0
        %v1138 = vpop.f32.mrb[0].mxu0
        %v1139 = vadd.f32 0.0, %v1138
        %v1140 = vpop.f32.mrb[0].mxu0
        %1141 = vmatprep.mubr.bf16.mxu0 0
        %1142 = vmatmul.mubr.bf16.gmra.mrb[0].mxu0 %v1022
        %v1143 = vpop.f32.mrb[0].mxu0
        %v1144 = vadd.f32 0.0, %v1143
        %v1145 = vpop.f32.mrb[0].mxu0
        %v1146 = vpop.f32.mrb[0].mxu0
        %v1147 = vadd.f32 0.0, %v1146
        %v1148 = vpop.f32.mrb[0].mxu0
        %1149 = vmatprep.mubr.bf16.mxu0 0
        %1150 = vmatmul.mubr.bf16.gmra.mrb[0].mxu0 %v1025
        %v1151 = vpop.f32.mrb[0].mxu0
        %v1152 = vadd.f32 0.0, %v1151
        %v1153 = vpop.f32.mrb[0].mxu0
        %v1154 = vpop.f32.mrb[0].mxu0
        %v1155 = vadd.f32 0.0, %v1154
        %v1156 = vpop.f32.mrb[0].mxu0
        %1157 = vmatprep.mubr.bf16.mxu0 0
        %1158 = vmatmul.mubr.bf16.gmra.mrb[0].mxu0 %v1028
        %v1159 = vpop.f32.mrb[0].mxu0
        %v1160 = vadd.f32 0.0, %v1159
        %v1161 = vpop.f32.mrb[0].mxu0
        %v1162 = vpop.f32.mrb[0].mxu0
        %v1163 = vadd.f32 0.0, %v1162
        %v1164 = vpop.f32.mrb[0].mxu0
        %1165 = vmatprep.mubr.bf16.mxu0 0
        %1166 = vmatmul.mubr.bf16.gmra.mrb[0].mxu0 %v1031
        %v1167 = vpop.f32.mrb[0].mxu0
        %v1168 = vadd.f32 0.0, %v1167
        %v1169 = vpop.f32.mrb[0].mxu0
        %v1170 = vpop.f32.mrb[0].mxu0
        %v1171 = vadd.f32 0.0, %v1170
        %v1172 = vpop.f32.mrb[0].mxu0
        %1173 = vmatprep.mubr.bf16.mxu0 0
        %1174 = vmatmul.mubr.bf16.gmra.mrb[0].mxu0 %v1034
        %v1175 = vpop.f32.mrb[0].mxu0
        %v1176 = vadd.f32 0.0, %v1175
        %v1177 = vpop.f32.mrb[0].mxu0
        %v1178 = vpop.f32.mrb[0].mxu0
        %v1179 = vadd.f32 0.0, %v1178
        %v1180 = vpop.f32.mrb[0].mxu0
        %1181 = vmatprep.mubr.bf16.mxu0 0
        %1182 = vmatmul.mubr.bf16.gmra.mrb[0].mxu0 %v1037
        %v1183 = vpop.f32.mrb[0].mxu0
        %v1184 = vadd.f32 0.0, %v1183
        %v1185 = vpop.f32.mrb[0].mxu0
        %v1186 = vpop.f32.mrb[0].mxu0
        %v1187 = vadd.f32 0.0, %v1186
        %v1188 = vpop.f32.mrb[0].mxu0
        %1189 = vmatprep.mubr.bf16.mxu0 0
        %1190 = vmatmul.mubr.bf16.gmra.mrb[0].mxu0 %v1040
        %v1191 = vpop.f32.mrb[0].mxu0
        %v1192 = vadd.f32 0.0, %v1191
        %v1193 = vpop.f32.mrb[0].mxu0
        %v1194 = vpop.f32.mrb[0].mxu0
        %v1195 = vadd.f32 0.0, %v1194
        %v1196 = vpop.f32.mrb[0].mxu0
        %1197 = vmatprep.mubr.bf16.mxu0 0
        %1198 = vmatmul.mubr.bf16.gmra.mrb[0].mxu0 %v1043
        %v1199 = vpop.f32.mrb[0].mxu0
        %v1200 = vadd.f32 0.0, %v1199
        %v1201 = vpop.f32.mrb[0].mxu0
        %v1202 = vpop.f32.mrb[0].mxu0
        %v1203 = vadd.f32 0.0, %v1202
        %v1204 = vpop.f32.mrb[0].mxu0
        %1205 = vdwg.mxu0
        %1206 = vst [vmem:[%s341] sm:$0xff] %v1080
        %1207 = vst [vmem:[%s341 + $0x8] sm:$0xff] %v1083
        %1208 = vst [vmem:[%s341 + $0x10] sm:$0xff] %v1088
        %1209 = vst [vmem:[%s341 + $0x18] sm:$0xff] %v1091
        %1210 = vst [vmem:[%s341 + $0x20] sm:$0xff] %v1096
        %1211 = vst [vmem:[%s341 + $0x28] sm:$0xff] %v1099
        %1212 = vst [vmem:[%s341 + $0x30] sm:$0xff] %v1104
        %1213 = vst [vmem:[%s341 + $0x38] sm:$0xff] %v1107
        %1214 = vst [vmem:[%s341 + $0x40] sm:$0xff] %v1112
        %1215 = vst [vmem:[%s341 + $0x48] sm:$0xff] %v1115
        %1216 = vst [vmem:[%s341 + $0x50] sm:$0xff] %v1120
        %1217 = vst [vmem:[%s341 + $0x58] sm:$0xff] %v1123
        %1218 = vst [vmem:[%s341 + $0x60] sm:$0xff] %v1128
        %1219 = vst [vmem:[%s341 + $0x68] sm:$0xff] %v1131
        %1220 = vst [vmem:[%s341 + $0x70] sm:$0xff] %v1136
        %1221 = vst [vmem:[%s341 + $0x78] sm:$0xff] %v1139
        %1222 = vst [vmem:[%s341 + $0x80] sm:$0xff] %v1144
        %1223 = vst [vmem:[%s341 + $0x88] sm:$0xff] %v1147
        %1224 = vst [vmem:[%s341 + $0x90] sm:$0xff] %v1152
        %1225 = vst [vmem:[%s341 + $0x98] sm:$0xff] %v1155
        %1226 = vst [vmem:[%s341 + $0xa0] sm:$0xff] %v1160
        %1227 = vst [vmem:[%s341 + $0xa8] sm:$0xff] %v1163
        %1228 = vst [vmem:[%s341 + $0xb0] sm:$0xff] %v1168
        %1229 = vst [vmem:[%s341 + $0xb8] sm:$0xff] %v1171
        %1230 = vst [vmem:[%s341 + $0xc0] sm:$0xff] %v1176
        %1231 = vst [vmem:[%s341 + $0xc8] sm:$0xff] %v1179
        %1232 = vst [vmem:[%s341 + $0xd0] sm:$0xff] %v1184
        %1233 = vst [vmem:[%s341 + $0xd8] sm:$0xff] %v1187
        %1234 = vst [vmem:[%s341 + $0xe0] sm:$0xff] %v1192
        %1235 = vst [vmem:[%s341 + $0xe8] sm:$0xff] %v1195
        %1236 = vst [vmem:[%s341 + $0xf0] sm:$0xff] %v1200
        %1237 = vst [vmem:[%s341 + $0xf8] sm:$0xff] %v1203
        %s1238 = sand.u32 %s204, 1
        %s1239 = scalar_lea.sflag [#allocation5], %s1238
        %s1240 = sand.u32 %s204, 1
        %s1241 = smul.addr %s1240, 256
        %s1242 = scalar_lea.vmem [#allocation8], %s1241
        // Predicated region
        $region61: #{tpu_custom_call.1} parent=47 // pred_check
          %p1243 = pneg %p214
        $region62: #{tpu_custom_call.1} parent=47 // pred_check_branch
          %1245 = sbr.rel (%p1243) target = $region64
        $region63: #{tpu_custom_call.1} parent=47 // pred_region
          %s1246 = smul.u32 32, %s30
          %s1248 = ssub.s32 4096, 4096
          %1249 = vsyncadd %s1239, %s1248
          %s1250 = smul.addr %s29, 32
          %s1251 = sadd.s32 %s1246, %s1250
          %s1252 = smul.addr %s1251, 128
          %s1253 = scalar_lea.hbm %s7, %s1252
          %s1254 = sshll.u32 %s1242, 4
          %s1255 = int_to_ptr.vmem [resolvable:$true] %s1254
          %1260 = dma.vmem_to_hbm [thread:$0]  %s1255, 4096, %s1253, %s1239, 128, 128, 8
        $region64: #{tpu_custom_call.1} parent=47 // pred_fallthru
          _
      $region48: #{tpu_custom_call.1} parent=5 // pred_fallthru
        _
      %p1261 = scmp.le.s32.totalorder 2, %s20
      // Predicated region
      $region65: #{tpu_custom_call.1} parent=5 // pred_check
        %p1262 = pneg %p1261
      $region66: #{tpu_custom_call.1} parent=5 // pred_check_branch
        %1264 = sbr.rel (%p1262) target = $region68
      $region67: #{tpu_custom_call.1} parent=5 // pred_region
        %s1265 = ssub.s32 %s20, 2
        // Predicated region
        $region69: #{tpu_custom_call.1} parent=67 // pred_check
          %p1266 = pneg %p220
        $region70: #{tpu_custom_call.1} parent=67 // pred_check_branch
          %1268 = sbr.rel (%p1266) target = $region72
        $region71: #{tpu_custom_call.1} parent=67 // pred_region
          %s1269 = sand.u32 %s205, 1
          %s1270 = scalar_lea.sflag [#allocation5], %s1269
          %s1271 = sand.u32 %s205, 1
          %s1272 = smul.addr %s1271, 256
          %s1273 = scalar_lea.vmem [#allocation8], %s1272
          %1274 = dma.done %s1270, 4096
        $region72: #{tpu_custom_call.1} parent=67 // pred_fallthru
          _
      $region68: #{tpu_custom_call.1} parent=5 // pred_fallthru
        _
    $region6: #{tpu_custom_call.1} parent=1 // loop_footer
      %s24 = sadd.s32 1, %s20
    $region7: #{tpu_custom_call.1} parent=1 // loop_footer_branch
      %19 = sbr.rel target = $region3
    $region8: #{tpu_custom_call.1} parent=1 // loop_exit
      _
    %1275 = vsyncpa [#allocation4], 1
    %s1276 = scalar_lea.sflag [#allocation4], 1
    %1277 = vsyncpa %s1276, 1
    %1278 = vsyncpa [#allocation7], 1
    %1279 = vsyncpa [#allocation5], 1
    %s1280 = scalar_lea.sflag [#allocation5], 1
    %1281 = vsyncpa %s1280, 1

</llo_original>
